<compile_context>
chip_gen: v6e
topology: v6e:2x2x1
jax: 0.10.0
libtpu: 0.0.40
codegen_flags: <defaults>
</compile_context>

<pallas_src>
import functools
import math

import jax
import jax.numpy as jnp
from jax import lax
from jax.experimental import pallas as pl
from jax.experimental.pallas import tpu as pltpu

HID = 64          # per-network hidden size from the PyTorch module
FUSED = 2 * HID   # fused hidden width (actor || critic) = 128 lanes


# --------------------------------------------------------------------------- #
# Kernel
# --------------------------------------------------------------------------- #
def _fused_kernel(x_ref, act_ref, stats_ref,
                  w1_ref, b1_ref, w2_ref, b2_ref, w3_ref, b3_ref,
                  out_ref, *, action_dim):
    cdt = w1_ref.dtype                              # f32 or bf16 (matmul operand dtype)

    x = x_ref[...].astype(cdt)                      # [TB, S]

    # Fused actor+critic MLP: two 128-lane matmuls, then a narrow OUT_W-lane head.
    h1 = jnp.tanh(jnp.dot(x, w1_ref[...],
                          preferred_element_type=jnp.float32) + b1_ref[...])     # [TB, 128]
    h2 = jnp.tanh(jnp.dot(h1.astype(cdt), w2_ref[...],
                          preferred_element_type=jnp.float32) + b2_ref[...])     # [TB, 128]
    z3 = (jnp.dot(h2.astype(cdt), w3_ref[...],
                  preferred_element_type=jnp.float32) + b3_ref[...])             # [TB, OUT_W]

    # Actor head applies tanh (lanes 0..A-1); critic head (lane A) stays linear.
    mean = jnp.tanh(z3)                             # [TB, OUT_W] (lane A unused from here)

    # diag-Gaussian log_prob with per-lane constants folded in:
    #   logp = -0.5 * sum_i ( diff_i^2 * ivar_i + log(2*pi) + log(var_i) )
    ivar = stats_ref[0:1, :]                        # [1, A]
    logc = stats_ref[1:2, :]                        # [1, A]
    diff = act_ref[...] - mean[:, :action_dim]      # [TB, A]
    logp = -0.5 * jnp.sum(diff * diff * ivar + logc,
                          axis=-1, keepdims=True)   # [TB, 1]

    # Pack the narrow slab: [mean(0..A-1) | value(A) | logp(A+1) | pad].
    # OUT_W is only ~8 lanes, so the iota + selects are a negligible VPU cost.
    lane = lax.broadcasted_iota(jnp.int32, z3.shape, 1)
    out_ref[...] = jnp.where(lane < action_dim, mean,
                             jnp.where(lane == action_dim, z3, logp))


# --------------------------------------------------------------------------- #
# Parameter construction / packing
# --------------------------------------------------------------------------- #
def linear_init(key, fan_in, fan_out):
    """PyTorch nn.Linear default init (uniform +-1/sqrt(fan_in)); weight stored [in, out]."""
    kw, kb = jax.random.split(key)
    bound = 1.0 / math.sqrt(fan_in)
    w = jax.random.uniform(kw, (fan_in, fan_out), jnp.float32, -bound, bound)
    b = jax.random.uniform(kb, (1, fan_out), jnp.float32, -bound, bound)
    return w, b


def make_params(key, state_dim, action_dim):
    keys = jax.random.split(key, 6)
    aw1, ab1 = linear_init(keys[0], state_dim, HID)
    aw2, ab2 = linear_init(keys[1], HID, HID)
    aw3, ab3 = linear_init(keys[2], HID, action_dim)
    cw1, cb1 = linear_init(keys[3], state_dim, HID)
    cw2, cb2 = linear_init(keys[4], HID, HID)
    cw3, cb3 = linear_init(keys[5], HID, 1)
    return (aw1, ab1, aw2, ab2, aw3, ab3, cw1, cb1, cw2, cb2, cw3, cb3)


def pack_params(params, state_dim, action_dim, out_w):
    """Fuse actor+critic weights into the 128-lane stack with a narrow OUT_W-lane head."""
    (aw1, ab1, aw2, ab2, aw3, ab3, cw1, cb1, cw2, cb2, cw3, cb3) = params

    W1 = jnp.concatenate([aw1, cw1], axis=1)                     # [S, 128]
    b1 = jnp.concatenate([ab1, cb1], axis=1)                     # [1, 128]

    W2 = jnp.zeros((FUSED, FUSED), jnp.float32)
    W2 = W2.at[:HID, :HID].set(aw2).at[HID:, HID:].set(cw2)      # [128, 128] block-diag
    b2 = jnp.concatenate([ab2, cb2], axis=1)                     # [1, 128]

    W3 = jnp.zeros((FUSED, out_w), jnp.float32)
    W3 = W3.at[:HID, :action_dim].set(aw3)                       # actor head -> lanes 0..A-1
    W3 = W3.at[HID:, action_dim:action_dim + 1].set(cw3)         # critic head -> lane A
    b3 = jnp.zeros((1, out_w), jnp.float32)
    b3 = b3.at[:, :action_dim].set(ab3)
    b3 = b3.at[:, action_dim:action_dim + 1].set(cb3)
    return W1, b1, W2, b2, W3, b3


def _round_up(x, m):
    return (x + m - 1) // m * m


# --------------------------------------------------------------------------- #
# Wrapper
# --------------------------------------------------------------------------- #
def actor_critic_evaluate(state, action, action_var, params,
                          *, use_bf16=False, tile_rows=1024):
    state = jnp.asarray(state, jnp.float32)
    action = jnp.asarray(action, jnp.float32)
    var = jnp.asarray(action_var, jnp.float32).reshape(-1)       # [A]

    B, S = state.shape
    A = action.shape[-1]
    out_w = max(8, _round_up(A + 2, 8))                          # narrow output width

    W1, b1, W2, b2, W3, b3 = pack_params(params, S, A, out_w)
    wdt = jnp.bfloat16 if use_bf16 else jnp.float32
    W1, W2, W3 = W1.astype(wdt), W2.astype(wdt), W3.astype(wdt)

    # Batch-invariant stats: row 0 = 1/var, row 1 = log(2*pi) + log(var) per lane.
    log2pi = jnp.float32(math.log(2.0 * math.pi))
    stats = jnp.stack([1.0 / var, jnp.log(var) + log2pi], axis=0)  # [2, A]

    # Batch tiling: no host padding; ragged last block handled by Pallas.
    # Keep >= 2 grid steps whenever B >= 16 so v7x's two TensorCores both work.
    TB = min(tile_rows, _round_up(B, 8))
    if B >= 16:
        TB = min(TB, _round_up((B + 1) // 2, 8))
    TB = max(TB, 8)
    grid = (pl.cdiv(B, TB),)

    kernel = functools.partial(_fused_kernel, action_dim=A)

    slab = pl.pallas_call(
        kernel,
        out_shape=jax.ShapeDtypeStruct((B, out_w), jnp.float32),
        grid=grid,
        in_specs=[
            pl.BlockSpec((TB, S), lambda i: (i, 0)),             # state tile (narrow, unpadded)
            pl.BlockSpec((TB, A), lambda i: (i, 0)),             # action tile (narrow, unpadded)
            pl.BlockSpec((2, A), lambda i: (0, 0)),              # stats (resident)
            pl.BlockSpec((S, FUSED), lambda i: (0, 0)),          # W1
            pl.BlockSpec((1, FUSED), lambda i: (0, 0)),          # b1
            pl.BlockSpec((FUSED, FUSED), lambda i: (0, 0)),      # W2
            pl.BlockSpec((1, FUSED), lambda i: (0, 0)),          # b2
            pl.BlockSpec((FUSED, out_w), lambda i: (0, 0)),      # W3 (narrow head)
            pl.BlockSpec((1, out_w), lambda i: (0, 0)),          # b3
        ],
        out_specs=pl.BlockSpec((TB, out_w), lambda i: (i, 0)),   # narrow output slab
        compiler_params=pltpu.CompilerParams(
            dimension_semantics=("parallel",)),
    )(state, action, stats, W1, b1, W2, b2, W3, b3)

    # Host-side unpack (cheap slices of the narrow slab).
    mean = slab[:, :A]
    val = slab[:, A:A + 1]
    logp = slab[:, A + 1:A + 2]
    # Entropy depends only on action_var -> computed on host, broadcast to [B, 1].
    logdet = jnp.sum(jnp.log(var))
    ent = jnp.broadcast_to(0.5 * (jnp.float32(A) * (log2pi + 1.0) + logdet), (B, 1))
    return mean, logp, val, ent


# --------------------------------------------------------------------------- #
# Pure-JAX reference (matches the PyTorch module's evaluate())
# --------------------------------------------------------------------------- #
def reference_evaluate(state, action, action_var, params):
    (aw1, ab1, aw2, ab2, aw3, ab3, cw1, cb1, cw2, cb2, cw3, cb3) = params
    h = jnp.tanh(state @ aw1 + ab1)
    h = jnp.tanh(h @ aw2 + ab2)
    mean = jnp.tanh(h @ aw3 + ab3)
    c = jnp.tanh(state @ cw1 + cb1)
    c = jnp.tanh(c @ cw2 + cb2)
    val = c @ cw3 + cb3
    A = mean.shape[-1]
    var = jnp.asarray(action_var, jnp.float32).reshape(1, -1)
    log2pi = math.log(2.0 * math.pi)
    diff = action - mean
    quad = jnp.sum(diff * diff / var, axis=-1, keepdims=True)
    logdet = jnp.sum(jnp.log(var), axis=-1, keepdims=True)
    logp = -0.5 * (quad + A * log2pi + logdet)
    ent = jnp.broadcast_to(0.5 * (A * (log2pi + 1.0) + logdet), logp.shape)
    return mean, logp, val, ent


if __name__ == "__main__":
    state_dim = 32
    action_dim = 4
    action_std_init = 0.6

    key = jax.random.PRNGKey(0)
    k_params, k_state, k_action, k_state2, k_action2 = jax.random.split(key, 5)

    params = make_params(k_params, state_dim, action_dim)
    action_var = jnp.full((action_dim,), action_std_init * action_std_init, jnp.float32)

    # --- small-batch check (single tile) ---
    batch = 8
    state = jax.random.normal(k_state, (batch, state_dim), jnp.float32)
    action = jax.random.normal(k_action, (batch, action_dim), jnp.float32)

    outs = actor_critic_evaluate(state, action, action_var, params)
    outs = jax.block_until_ready(outs)
    refs = reference_evaluate(state, action, action_var, params)
    for o, r in zip(outs, refs):
        assert o.shape == r.shape
        assert jnp.max(jnp.abs(o - r)) < 1e-4

    # --- multi-tile check (exercises >=2 grid steps + ragged last block) ---
    batch2 = 300
    state2 = jax.random.normal(k_state2, (batch2, state_dim), jnp.float32)
    action2 = jax.random.normal(k_action2, (batch2, action_dim), jnp.float32)

    outs2 = actor_critic_evaluate(state2, action2, action_var, params)
    outs2 = jax.block_until_ready(outs2)
    refs2 = reference_evaluate(state2, action2, action_var, params)
    for o, r in zip(outs2, refs2):
        assert o.shape == r.shape
        assert jnp.max(jnp.abs(o - r)) < 1e-4

    print("KERNEL_OK")
</pallas_src>

<mosaic_0001>
module attributes {stable_mosaic.version = 11 : i64} {
  func.func @_fused_kernel(%arg0: i32, %arg1: memref<8x32xf32, #tpu.memory_space<vmem>>, %arg2: memref<8x4xf32, #tpu.memory_space<vmem>>, %arg3: memref<2x4xf32, #tpu.memory_space<vmem>>, %arg4: memref<32x128xf32, #tpu.memory_space<vmem>>, %arg5: memref<1x128xf32, #tpu.memory_space<vmem>>, %arg6: memref<128x128xf32, #tpu.memory_space<vmem>>, %arg7: memref<1x128xf32, #tpu.memory_space<vmem>>, %arg8: memref<128x8xf32, #tpu.memory_space<vmem>>, %arg9: memref<1x8xf32, #tpu.memory_space<vmem>>, %arg10: memref<8x8xf32, #tpu.memory_space<vmem>>) attributes {dimension_semantics = [#tpu.dimension_semantics<parallel>], iteration_bounds = array<i64: 1>, scalar_prefetch = 0 : i64, scratch_operands = 0 : i64, tpu.core_type = #tpu.core_type<tc>, window_params = [{transform_indices = @transform_0, window_bounds = array<i64: 8, 32>}, {transform_indices = @transform_1, window_bounds = array<i64: 8, 4>}, {pipeline_mode = #tpu.pipeline_mode<synchronous>, transform_indices = @transform_2, window_bounds = array<i64: 2, 4>}, {pipeline_mode = #tpu.pipeline_mode<synchronous>, transform_indices = @transform_3, window_bounds = array<i64: 32, 128>}, {pipeline_mode = #tpu.pipeline_mode<synchronous>, transform_indices = @transform_4, window_bounds = array<i64: 1, 128>}, {pipeline_mode = #tpu.pipeline_mode<synchronous>, transform_indices = @transform_5, window_bounds = array<i64: 128, 128>}, {pipeline_mode = #tpu.pipeline_mode<synchronous>, transform_indices = @transform_6, window_bounds = array<i64: 1, 128>}, {pipeline_mode = #tpu.pipeline_mode<synchronous>, transform_indices = @transform_7, window_bounds = array<i64: 128, 8>}, {pipeline_mode = #tpu.pipeline_mode<synchronous>, transform_indices = @transform_8, window_bounds = array<i64: 1, 8>}, {transform_indices = @transform_9, window_bounds = array<i64: 8, 8>}]} {
    %c0 = arith.constant 0 : index
    %c0_0 = arith.constant 0 : index
    %0 = vector.load %arg1[%c0, %c0_0] : memref<8x32xf32, #tpu.memory_space<vmem>>, vector<8x32xf32>
    %c0_1 = arith.constant 0 : index
    %c0_2 = arith.constant 0 : index
    %1 = vector.load %arg4[%c0_1, %c0_2] : memref<32x128xf32, #tpu.memory_space<vmem>>, vector<32x128xf32>
    %cst = arith.constant dense<0.000000e+00> : vector<8x128xf32>
    %2 = tpu.matmul %0, %1, %cst {dimension_numbers = #tpu.dot_dimension_numbers<[1], [0], [0], [1], [0, 0, 1, 1], [], []>} : vector<8x32xf32>, vector<32x128xf32>, vector<8x128xf32> -> vector<8x128xf32>
    %c0_3 = arith.constant 0 : index
    %c0_4 = arith.constant 0 : index
    %3 = vector.load %arg5[%c0_3, %c0_4] : memref<1x128xf32, #tpu.memory_space<vmem>>, vector<1x128xf32>
    %4 = vector.broadcast %3 : vector<1x128xf32> to vector<8x128xf32>
    %5 = arith.addf %2, %4 : vector<8x128xf32>
    %6 = math.tanh %5 : vector<8x128xf32>
    %c0_5 = arith.constant 0 : index
    %c0_6 = arith.constant 0 : index
    %7 = vector.load %arg6[%c0_5, %c0_6] : memref<128x128xf32, #tpu.memory_space<vmem>>, vector<128x128xf32>
    %cst_7 = arith.constant dense<0.000000e+00> : vector<8x128xf32>
    %8 = tpu.matmul %6, %7, %cst_7 {dimension_numbers = #tpu.dot_dimension_numbers<[1], [0], [0], [1], [0, 0, 1, 1], [], []>} : vector<8x128xf32>, vector<128x128xf32>, vector<8x128xf32> -> vector<8x128xf32>
    %c0_8 = arith.constant 0 : index
    %c0_9 = arith.constant 0 : index
    %9 = vector.load %arg7[%c0_8, %c0_9] : memref<1x128xf32, #tpu.memory_space<vmem>>, vector<1x128xf32>
    %10 = vector.broadcast %9 : vector<1x128xf32> to vector<8x128xf32>
    %11 = arith.addf %8, %10 : vector<8x128xf32>
    %12 = math.tanh %11 : vector<8x128xf32>
    %c0_10 = arith.constant 0 : index
    %c0_11 = arith.constant 0 : index
    %13 = vector.load %arg8[%c0_10, %c0_11] : memref<128x8xf32, #tpu.memory_space<vmem>>, vector<128x8xf32>
    %cst_12 = arith.constant dense<0.000000e+00> : vector<8x8xf32>
    %14 = tpu.matmul %12, %13, %cst_12 {dimension_numbers = #tpu.dot_dimension_numbers<[1], [0], [0], [1], [0, 0, 1, 1], [], []>} : vector<8x128xf32>, vector<128x8xf32>, vector<8x8xf32> -> vector<8x8xf32>
    %c0_13 = arith.constant 0 : index
    %c0_14 = arith.constant 0 : index
    %15 = vector.load %arg9[%c0_13, %c0_14] : memref<1x8xf32, #tpu.memory_space<vmem>>, vector<1x8xf32>
    %16 = vector.broadcast %15 : vector<1x8xf32> to vector<8x8xf32>
    %17 = arith.addf %14, %16 : vector<8x8xf32>
    %18 = math.tanh %17 : vector<8x8xf32>
    %c0_15 = arith.constant 0 : index
    %c0_16 = arith.constant 0 : index
    %19 = vector.load %arg3[%c0_15, %c0_16] : memref<2x4xf32, #tpu.memory_space<vmem>>, vector<1x4xf32>
    %c1 = arith.constant 1 : index
    %c0_17 = arith.constant 0 : index
    %20 = vector.load %arg3[%c1, %c0_17] : memref<2x4xf32, #tpu.memory_space<vmem>>, vector<1x4xf32>
    %c0_18 = arith.constant 0 : index
    %c0_19 = arith.constant 0 : index
    %21 = vector.load %arg2[%c0_18, %c0_19] : memref<8x4xf32, #tpu.memory_space<vmem>>, vector<8x4xf32>
    %22 = vector.extract_strided_slice %18 {offsets = [0, 0], sizes = [8, 4], strides = [1, 1]} : vector<8x8xf32> to vector<8x4xf32>
    %23 = arith.subf %21, %22 : vector<8x4xf32>
    %24 = arith.mulf %23, %23 : vector<8x4xf32>
    %25 = vector.broadcast %19 : vector<1x4xf32> to vector<8x4xf32>
    %26 = arith.mulf %24, %25 : vector<8x4xf32>
    %27 = vector.broadcast %20 : vector<1x4xf32> to vector<8x4xf32>
    %28 = arith.addf %26, %27 : vector<8x4xf32>
    %cst_20 = arith.constant dense<0.000000e+00> : vector<8xf32>
    %29 = vector.multi_reduction <add>, %28, %cst_20 [1] : vector<8x4xf32> to vector<8xf32>
    %30 = vector.shape_cast %29 : vector<8xf32> to vector<8x1xf32>
    %cst_21 = arith.constant -5.000000e-01 : f32
    %31 = vector.broadcast %cst_21 : f32 to vector<8x1xf32>
    %32 = arith.mulf %31, %30 : vector<8x1xf32>
    %33 = tpu.iota {dimensions = array<i32: 1>} : vector<8x8xi32>
    %c4_i32 = arith.constant 4 : i32
    %34 = vector.broadcast %c4_i32 : i32 to vector<8x8xi32>
    %35 = arith.cmpi slt, %33, %34 : vector<8x8xi32>
    %c4_i32_22 = arith.constant 4 : i32
    %36 = vector.broadcast %c4_i32_22 : i32 to vector<8x8xi32>
    %37 = arith.cmpi eq, %33, %36 : vector<8x8xi32>
    %38 = vector.shape_cast %32 : vector<8x1xf32> to vector<8x1xf32>
    %39 = vector.broadcast %38 : vector<8x1xf32> to vector<8x8xf32>
    %40 = arith.select %37, %17, %39 : vector<8x8xi1>, vector<8x8xf32>
    %41 = arith.select %35, %18, %40 : vector<8x8xi1>, vector<8x8xf32>
    %c0_23 = arith.constant 0 : index
    %c0_24 = arith.constant 0 : index
    %42 = vector.load %arg10[%c0_23, %c0_24] : memref<8x8xf32, #tpu.memory_space<vmem>>, vector<8x8xf32>
    tpu.vector_store %arg10[%c0_23, %c0_24], %41 {strides = array<i32>} : memref<8x8xf32, #tpu.memory_space<vmem>>, vector<8x8xf32>,
    return
  }
  func.func @transform_0(%arg0: i32) -> (i32, i32) {
    %c0_i32 = arith.constant 0 : i32
    %c0_i32_0 = arith.constant 0 : i32
    return %arg0, %c0_i32 : i32, i32
  }
  func.func @transform_1(%arg0: i32) -> (i32, i32) {
    %c0_i32 = arith.constant 0 : i32
    %c0_i32_0 = arith.constant 0 : i32
    return %arg0, %c0_i32 : i32, i32
  }
  func.func @transform_2(%arg0: i32) -> (i32, i32) {
    %c0_i32 = arith.constant 0 : i32
    %c0_i32_0 = arith.constant 0 : i32
    %c0_i32_1 = arith.constant 0 : i32
    return %c0_i32, %c0_i32_0 : i32, i32
  }
  func.func @transform_3(%arg0: i32) -> (i32, i32) {
    %c0_i32 = arith.constant 0 : i32
    %c0_i32_0 = arith.constant 0 : i32
    %c0_i32_1 = arith.constant 0 : i32
    return %c0_i32, %c0_i32_0 : i32, i32
  }
  func.func @transform_4(%arg0: i32) -> (i32, i32) {
    %c0_i32 = arith.constant 0 : i32
    %c0_i32_0 = arith.constant 0 : i32
    %c0_i32_1 = arith.constant 0 : i32
    return %c0_i32, %c0_i32_0 : i32, i32
  }
  func.func @transform_5(%arg0: i32) -> (i32, i32) {
    %c0_i32 = arith.constant 0 : i32
    %c0_i32_0 = arith.constant 0 : i32
    %c0_i32_1 = arith.constant 0 : i32
    return %c0_i32, %c0_i32_0 : i32, i32
  }
  func.func @transform_6(%arg0: i32) -> (i32, i32) {
    %c0_i32 = arith.constant 0 : i32
    %c0_i32_0 = arith.constant 0 : i32
    %c0_i32_1 = arith.constant 0 : i32
    return %c0_i32, %c0_i32_0 : i32, i32
  }
  func.func @transform_7(%arg0: i32) -> (i32, i32) {
    %c0_i32 = arith.constant 0 : i32
    %c0_i32_0 = arith.constant 0 : i32
    %c0_i32_1 = arith.constant 0 : i32
    return %c0_i32, %c0_i32_0 : i32, i32
  }
  func.func @transform_8(%arg0: i32) -> (i32, i32) {
    %c0_i32 = arith.constant 0 : i32
    %c0_i32_0 = arith.constant 0 : i32
    %c0_i32_1 = arith.constant 0 : i32
    return %c0_i32, %c0_i32_0 : i32, i32
  }
  func.func @transform_9(%arg0: i32) -> (i32, i32) {
    %c0_i32 = arith.constant 0 : i32
    %c0_i32_0 = arith.constant 0 : i32
    return %arg0, %c0_i32 : i32, i32
  }
}

</mosaic_0001>

<llo_original>
// kernel: tpu_custom_call.1
$region0: #{tpu_custom_call.1}
  #allocation0 [shape = 'u32[]', space=smem, size = 0x4, offset = 0x4, fixed_abs, tag = 'smem constant byte address 0x4 - core index']
  #allocation1 [shape = 'u32[144,128]{1,0:T(1,128)}', space=vmem, size = 0x12000, scoped, tag = 'internal scratch']
  %s0 = inlined_call_operand.vmem [shape: f32[8,32], index: 0, kind: input, shape index: {}]
  %s1 = inlined_call_operand.vmem [shape: f32[8,4], index: 1, kind: input, shape index: {}]
  %s2 = inlined_call_operand.vmem [shape: f32[2,4], index: 2, kind: input, shape index: {}]
  %s3 = inlined_call_operand.hbm [shape: f32[32,128], index: 3, kind: input, shape index: {}]
  %s4 = inlined_call_operand.vmem [shape: f32[1,128], index: 4, kind: input, shape index: {}]
  %s5 = inlined_call_operand.vmem [shape: f32[128,128], index: 5, kind: input, shape index: {}]
  %s6 = inlined_call_operand.vmem [shape: f32[1,128], index: 6, kind: input, shape index: {}]
  %s7 = inlined_call_operand.vmem [shape: f32[128,8], index: 7, kind: input, shape index: {}]
  %s8 = inlined_call_operand.vmem [shape: f32[1,8], index: 8, kind: input, shape index: {}]
  %s9 = inlined_call_operand.hbm [shape: f32[8,8], index: 9, kind: output, shape index: {}]
  %s10 = sld [smem:[#allocation0]]
  $region50: #{tpu_custom_call.1} parent=0
    _
  %s12 = ssub.s32 1, %s10
  %s13 = scalar_select 0, %s12, %s10
  $region1: #{tpu_custom_call.1} parent=0
    #allocation2 [shape = 'u8[16384]{0}', space=vmem, size = 0x4000, scoped, tag = 'input window, operand 3, single buffered']
    #allocation3 [shape = 's32[1]{0}', space=sflag, size = 0x4, scoped, tag = 'scoped memory for tpu_custom_call.1']
    #allocation4 [shape = 's32[1]{0}', space=sflag, size = 0x4, scoped, tag = 'scoped memory for tpu_custom_call.1']
    #allocation5 [shape = 'u8[4096]{0}', space=vmem, size = 0x1000, scoped, tag = 'output window, operand 0, single buffered']
    %14 = vsyncpa [#allocation3], 0
    %15 = vsyncpa [#allocation4], 0
    // Predicated region
    $region2: #{tpu_custom_call.1} parent=1 // pred_check
      _
    $region3: #{tpu_custom_call.1} parent=1 // pred_check_branch
      %17 = sbr.rel (0) target = $region5
    $region4: #{tpu_custom_call.1} parent=1 // pred_region
      _
    $region5: #{tpu_custom_call.1} parent=1 // pred_fallthru
      _
    // Predicated region
    $region6: #{tpu_custom_call.1} parent=1 // pred_check
      _
    $region7: #{tpu_custom_call.1} parent=1 // pred_check_branch
      %19 = sbr.rel (0) target = $region9
    $region8: #{tpu_custom_call.1} parent=1 // pred_region
      _
    $region9: #{tpu_custom_call.1} parent=1 // pred_fallthru
      _
    // Predicated region
    $region10: #{tpu_custom_call.1} parent=1 // pred_check
      _
    $region11: #{tpu_custom_call.1} parent=1 // pred_check_branch
      %21 = sbr.rel (0) target = $region13
    $region12: #{tpu_custom_call.1} parent=1 // pred_region
      _
    $region13: #{tpu_custom_call.1} parent=1 // pred_fallthru
      _
    // Predicated region
    $region14: #{tpu_custom_call.1} parent=1 // pred_check
      _
    $region15: #{tpu_custom_call.1} parent=1 // pred_check_branch
      %23 = sbr.rel (0) target = $region17
    $region16: #{tpu_custom_call.1} parent=1 // pred_region
      %s25 = ssub.s32 512, 512
      %26 = vsyncadd [#allocation3], %s25
      %s27 = sshll.u32 [#allocation2], 4
      %s28 = int_to_ptr.vmem [resolvable:$true] %s27
      %33 = dma.hbm_to_vmem [thread:$0]  %s3, 512, %s28, [#allocation3], 128, 128, 8
    $region17: #{tpu_custom_call.1} parent=1 // pred_fallthru
      _
    // Predicated region
    $region18: #{tpu_custom_call.1} parent=1 // pred_check
      _
    $region19: #{tpu_custom_call.1} parent=1 // pred_check_branch
      %35 = sbr.rel (0) target = $region21
    $region20: #{tpu_custom_call.1} parent=1 // pred_region
      _
    $region21: #{tpu_custom_call.1} parent=1 // pred_fallthru
      _
    // Predicated region
    $region22: #{tpu_custom_call.1} parent=1 // pred_check
      _
    $region23: #{tpu_custom_call.1} parent=1 // pred_check_branch
      %37 = sbr.rel (0) target = $region25
    $region24: #{tpu_custom_call.1} parent=1 // pred_region
      _
    $region25: #{tpu_custom_call.1} parent=1 // pred_fallthru
      _
    // Predicated region
    $region26: #{tpu_custom_call.1} parent=1 // pred_check
      _
    $region27: #{tpu_custom_call.1} parent=1 // pred_check_branch
      %39 = sbr.rel (0) target = $region29
    $region28: #{tpu_custom_call.1} parent=1 // pred_region
      _
    $region29: #{tpu_custom_call.1} parent=1 // pred_fallthru
      _
    // Predicated region
    $region30: #{tpu_custom_call.1} parent=1 // pred_check
      _
    $region31: #{tpu_custom_call.1} parent=1 // pred_check_branch
      %41 = sbr.rel (0) target = $region33
    $region32: #{tpu_custom_call.1} parent=1 // pred_region
      _
    $region33: #{tpu_custom_call.1} parent=1 // pred_fallthru
      _
    // Predicated region
    $region34: #{tpu_custom_call.1} parent=1 // pred_check
      _
    $region35: #{tpu_custom_call.1} parent=1 // pred_check_branch
      %43 = sbr.rel (0) target = $region37
    $region36: #{tpu_custom_call.1} parent=1 // pred_region
      _
    $region37: #{tpu_custom_call.1} parent=1 // pred_fallthru
      _
    // Predicated region
    $region38: #{tpu_custom_call.1} parent=1 // pred_check
      _
    $region39: #{tpu_custom_call.1} parent=1 // pred_check_branch
      %45 = sbr.rel (0) target = $region41
    $region40: #{tpu_custom_call.1} parent=1 // pred_region
      %46 = dma.done [#allocation3], 512
    $region41: #{tpu_custom_call.1} parent=1 // pred_fallthru
      _
    %v47 = vld [vmem:[%s0] sm:$0xff]
    %v48 = vld [vmem:[#allocation2] sm:$0xff]
    %v49 = vld [vmem:[#allocation2 + $0x8] sm:$0xff]
    %v50 = vld [vmem:[#allocation2 + $0x10] sm:$0xff]
    %v51 = vld [vmem:[#allocation2 + $0x18] sm:$0xff]
    %v52 = vld [vmem:[%s4] sm:$0x1]
    %v54 = vlaneseq
    %v55 = vshrl.u32 %v54, 7
    %v56 = vsub.s32 0, %v55
    %v57 = vrot.slane %v52, %v56
    %vm59 = vcmask 261120
    %v61 = vsel %vm59, %v47, 0
    %63 = vmatprep.subr.mxu0 0.0
    %64 = vmatpush1.msra.mxu0 0.0
    %65 = vmatprep.subr.mxu0 0.0
    %66 = vmatpush1.msra.mxu0 0.0
    %67 = vmatprep.subr.mxu0 0.0
    %68 = vmatpush1.msra.mxu0 0.0
    %69 = vmatprep.subr.mxu0 0.0
    %70 = vmatpush1.msra.mxu0 0.0
    %71 = vmatprep.subr.mxu0 0.0
    %72 = vmatpush1.msra.mxu0 0.0
    %73 = vmatprep.subr.mxu0 0.0
    %74 = vmatpush1.msra.mxu0 0.0
    %75 = vmatprep.subr.mxu0 0.0
    %76 = vmatpush1.msra.mxu0 0.0
    %77 = vmatprep.subr.mxu0 0.0
    %78 = vmatpush1.msra.mxu0 0.0
    %79 = vmatprep.subr.mxu0 0.0
    %80 = vmatpush1.msra.mxu0 0.0
    %81 = vmatprep.subr.mxu0 0.0
    %82 = vmatpush1.msra.mxu0 0.0
    %83 = vmatprep.subr.mxu0 0.0
    %84 = vmatpush1.msra.mxu0 0.0
    %85 = vmatprep.subr.mxu0 0.0
    %86 = vmatpush1.msra.mxu0 0.0
    %87 = vmatprep.subr.mxu0 0.0
    %88 = vmatpush1.msra.mxu0 %v51
    %89 = vmatprep.subr.mxu0 0.0
    %90 = vmatpush1.msra.mxu0 %v50
    %91 = vmatprep.subr.mxu0 0.0
    %92 = vmatpush1.msra.mxu0 %v49
    %93 = vmatprep.subr.mxu0 0.0
    %94 = vmatpush1.msra.mxu0 %v48
    %95 = vmatprep.subr.mxu0 0.0
    %96 = vmatpush2.msra.mxu0 0.0
    %97 = vmatprep.subr.mxu0 0.0
    %98 = vmatpush2.msra.mxu0 0.0
    %99 = vmatprep.subr.mxu0 0.0
    %100 = vmatpush2.msra.mxu0 0.0
    %101 = vmatprep.subr.mxu0 0.0
    %102 = vmatpush2.msra.mxu0 0.0
    %103 = vmatprep.subr.mxu0 0.0
    %104 = vmatpush2.msra.mxu0 0.0
    %105 = vmatprep.subr.mxu0 0.0
    %106 = vmatpush2.msra.mxu0 0.0
    %107 = vmatprep.subr.mxu0 0.0
    %108 = vmatpush2.msra.mxu0 0.0
    %109 = vmatprep.subr.mxu0 0.0
    %110 = vmatpush2.msra.mxu0 0.0
    %111 = vmatprep.subr.mxu0 0.0
    %112 = vmatpush2.msra.mxu0 0.0
    %113 = vmatprep.subr.mxu0 0.0
    %114 = vmatpush2.msra.mxu0 0.0
    %115 = vmatprep.subr.mxu0 0.0
    %116 = vmatpush2.msra.mxu0 0.0
    %117 = vmatprep.subr.mxu0 0.0
    %118 = vmatpush2.msra.mxu0 0.0
    %119 = vmatprep.subr.mxu0 0.0
    %120 = vmatpush2.msra.mxu0 0.0
    %121 = vmatprep.subr.mxu0 0.0
    %122 = vmatpush2.msra.mxu0 0.0
    %123 = vmatprep.subr.mxu0 0.0
    %124 = vmatpush2.msra.mxu0 0.0
    %125 = vmatprep.subr.mxu0 0.0
    %126 = vmatpush2.msra.mxu0 0.0
    %127 = vmatprep.mubr.f32.mxu0 0.0
    %128 = vmatmul.mubr.f32.gmra.mxu0 %v61
    %v129 = vpop.f32.mrf.mxu0
    %v130 = vadd.f32 %v57, %v129
    %v131 = vpop.f32.mrf.mxu0
    %132 = vdwg.mxu0
    %v133 = vtanh.pop %v130
    %v134 = vld [vmem:[%s5] sm:$0xff]
    %v135 = vld [vmem:[%s5 + $0x8] sm:$0xff]
    %v136 = vld [vmem:[%s5 + $0x10] sm:$0xff]
    %v137 = vld [vmem:[%s5 + $0x18] sm:$0xff]
    %v138 = vld [vmem:[%s5 + $0x20] sm:$0xff]
    %v139 = vld [vmem:[%s5 + $0x28] sm:$0xff]
    %v140 = vld [vmem:[%s5 + $0x30] sm:$0xff]
    %v141 = vld [vmem:[%s5 + $0x38] sm:$0xff]
    %v142 = vld [vmem:[%s5 + $0x40] sm:$0xff]
    %v143 = vld [vmem:[%s5 + $0x48] sm:$0xff]
    %v144 = vld [vmem:[%s5 + $0x50] sm:$0xff]
    %v145 = vld [vmem:[%s5 + $0x58] sm:$0xff]
    %v146 = vld [vmem:[%s5 + $0x60] sm:$0xff]
    %v147 = vld [vmem:[%s5 + $0x68] sm:$0xff]
    %v148 = vld [vmem:[%s5 + $0x70] sm:$0xff]
    %v149 = vld [vmem:[%s5 + $0x78] sm:$0xff]
    %v150 = vld [vmem:[%s6] sm:$0x1]
    %v152 = vlaneseq
    %v153 = vshrl.u32 %v152, 7
    %v154 = vsub.s32 0, %v153
    %v155 = vrot.slane %v150, %v154
    %157 = vmatprep.subr.mxu0 0.0
    %158 = vmatpush1.msra.mxu0 %v149
    %159 = vmatprep.subr.mxu0 0.0
    %160 = vmatpush1.msra.mxu0 %v148
    %161 = vmatprep.subr.mxu0 0.0
    %162 = vmatpush1.msra.mxu0 %v147
    %163 = vmatprep.subr.mxu0 0.0
    %164 = vmatpush1.msra.mxu0 %v146
    %165 = vmatprep.subr.mxu0 0.0
    %166 = vmatpush1.msra.mxu0 %v145
    %167 = vmatprep.subr.mxu0 0.0
    %168 = vmatpush1.msra.mxu0 %v144
    %169 = vmatprep.subr.mxu0 0.0
    %170 = vmatpush1.msra.mxu0 %v143
    %171 = vmatprep.subr.mxu0 0.0
    %172 = vmatpush1.msra.mxu0 %v142
    %173 = vmatprep.subr.mxu0 0.0
    %174 = vmatpush1.msra.mxu0 %v141
    %175 = vmatprep.subr.mxu0 0.0
    %176 = vmatpush1.msra.mxu0 %v140
    %177 = vmatprep.subr.mxu0 0.0
    %178 = vmatpush1.msra.mxu0 %v139
    %179 = vmatprep.subr.mxu0 0.0
    %180 = vmatpush1.msra.mxu0 %v138
    %181 = vmatprep.subr.mxu0 0.0
    %182 = vmatpush1.msra.mxu0 %v137
    %183 = vmatprep.subr.mxu0 0.0
    %184 = vmatpush1.msra.mxu0 %v136
    %185 = vmatprep.subr.mxu0 0.0
    %186 = vmatpush1.msra.mxu0 %v135
    %187 = vmatprep.subr.mxu0 0.0
    %188 = vmatpush1.msra.mxu0 %v134
    %189 = vmatprep.subr.mxu0 0.0
    %190 = vmatpush2.msra.mxu0 0.0
    %191 = vmatprep.subr.mxu0 0.0
    %192 = vmatpush2.msra.mxu0 0.0
    %193 = vmatprep.subr.mxu0 0.0
    %194 = vmatpush2.msra.mxu0 0.0
    %195 = vmatprep.subr.mxu0 0.0
    %196 = vmatpush2.msra.mxu0 0.0
    %197 = vmatprep.subr.mxu0 0.0
    %198 = vmatpush2.msra.mxu0 0.0
    %199 = vmatprep.subr.mxu0 0.0
    %200 = vmatpush2.msra.mxu0 0.0
    %201 = vmatprep.subr.mxu0 0.0
    %202 = vmatpush2.msra.mxu0 0.0
    %203 = vmatprep.subr.mxu0 0.0
    %204 = vmatpush2.msra.mxu0 0.0
    %205 = vmatprep.subr.mxu0 0.0
    %206 = vmatpush2.msra.mxu0 0.0
    %207 = vmatprep.subr.mxu0 0.0
    %208 = vmatpush2.msra.mxu0 0.0
    %209 = vmatprep.subr.mxu0 0.0
    %210 = vmatpush2.msra.mxu0 0.0
    %211 = vmatprep.subr.mxu0 0.0
    %212 = vmatpush2.msra.mxu0 0.0
    %213 = vmatprep.subr.mxu0 0.0
    %214 = vmatpush2.msra.mxu0 0.0
    %215 = vmatprep.subr.mxu0 0.0
    %216 = vmatpush2.msra.mxu0 0.0
    %217 = vmatprep.subr.mxu0 0.0
    %218 = vmatpush2.msra.mxu0 0.0
    %219 = vmatprep.subr.mxu0 0.0
    %220 = vmatpush2.msra.mxu0 0.0
    %221 = vmatprep.mubr.f32.mxu0 0.0
    %222 = vmatmul.mubr.f32.gmra.mxu0 %v133
    %v223 = vpop.f32.mrf.mxu0
    %v224 = vadd.f32 %v155, %v223
    %v225 = vpop.f32.mrf.mxu0
    %226 = vdwg.mxu0
    %v227 = vtanh.pop %v224
    %v228 = vld [vmem:[%s7] sm:$0xff]
    %v229 = vld [vmem:[%s7 + $0x8] sm:$0xff]
    %v230 = vld [vmem:[%s7 + $0x10] sm:$0xff]
    %v231 = vld [vmem:[%s7 + $0x18] sm:$0xff]
    %v232 = vld [vmem:[%s7 + $0x20] sm:$0xff]
    %v233 = vld [vmem:[%s7 + $0x28] sm:$0xff]
    %v234 = vld [vmem:[%s7 + $0x30] sm:$0xff]
    %v235 = vld [vmem:[%s7 + $0x38] sm:$0xff]
    %v236 = vld [vmem:[%s7 + $0x40] sm:$0xff]
    %v237 = vld [vmem:[%s7 + $0x48] sm:$0xff]
    %v238 = vld [vmem:[%s7 + $0x50] sm:$0xff]
    %v239 = vld [vmem:[%s7 + $0x58] sm:$0xff]
    %v240 = vld [vmem:[%s7 + $0x60] sm:$0xff]
    %v241 = vld [vmem:[%s7 + $0x68] sm:$0xff]
    %v242 = vld [vmem:[%s7 + $0x70] sm:$0xff]
    %v243 = vld [vmem:[%s7 + $0x78] sm:$0xff]
    %v244 = vld [vmem:[%s8] sm:$0x1]
    %v246 = vlaneseq
    %v247 = vshrl.u32 %v246, 7
    %v248 = vsub.s32 0, %v247
    %v249 = vrot.slane %v244, %v248
    %251 = vmatprep.subr.mxu0 0.0
    %252 = vmatpush1.msra.mxu0 %v243
    %253 = vmatprep.subr.mxu0 0.0
    %254 = vmatpush1.msra.mxu0 %v242
    %255 = vmatprep.subr.mxu0 0.0
    %256 = vmatpush1.msra.mxu0 %v241
    %257 = vmatprep.subr.mxu0 0.0
    %258 = vmatpush1.msra.mxu0 %v240
    %259 = vmatprep.subr.mxu0 0.0
    %260 = vmatpush1.msra.mxu0 %v239
    %261 = vmatprep.subr.mxu0 0.0
    %262 = vmatpush1.msra.mxu0 %v238
    %263 = vmatprep.subr.mxu0 0.0
    %264 = vmatpush1.msra.mxu0 %v237
    %265 = vmatprep.subr.mxu0 0.0
    %266 = vmatpush1.msra.mxu0 %v236
    %267 = vmatprep.subr.mxu0 0.0
    %268 = vmatpush1.msra.mxu0 %v235
    %269 = vmatprep.subr.mxu0 0.0
    %270 = vmatpush1.msra.mxu0 %v234
    %271 = vmatprep.subr.mxu0 0.0
    %272 = vmatpush1.msra.mxu0 %v233
    %273 = vmatprep.subr.mxu0 0.0
    %274 = vmatpush1.msra.mxu0 %v232
    %275 = vmatprep.subr.mxu0 0.0
    %276 = vmatpush1.msra.mxu0 %v231
    %277 = vmatprep.subr.mxu0 0.0
    %278 = vmatpush1.msra.mxu0 %v230
    %279 = vmatprep.subr.mxu0 0.0
    %280 = vmatpush1.msra.mxu0 %v229
    %281 = vmatprep.subr.mxu0 0.0
    %282 = vmatpush1.msra.mxu0 %v228
    %283 = vmatprep.subr.mxu0 0.0
    %284 = vmatpush2.msra.mxu0 0.0
    %285 = vmatprep.subr.mxu0 0.0
    %286 = vmatpush2.msra.mxu0 0.0
    %287 = vmatprep.subr.mxu0 0.0
    %288 = vmatpush2.msra.mxu0 0.0
    %289 = vmatprep.subr.mxu0 0.0
    %290 = vmatpush2.msra.mxu0 0.0
    %291 = vmatprep.subr.mxu0 0.0
    %292 = vmatpush2.msra.mxu0 0.0
    %293 = vmatprep.subr.mxu0 0.0
    %294 = vmatpush2.msra.mxu0 0.0
    %295 = vmatprep.subr.mxu0 0.0
    %296 = vmatpush2.msra.mxu0 0.0
    %297 = vmatprep.subr.mxu0 0.0
    %298 = vmatpush2.msra.mxu0 0.0
    %299 = vmatprep.subr.mxu0 0.0
    %300 = vmatpush2.msra.mxu0 0.0
    %301 = vmatprep.subr.mxu0 0.0
    %302 = vmatpush2.msra.mxu0 0.0
    %303 = vmatprep.subr.mxu0 0.0
    %304 = vmatpush2.msra.mxu0 0.0
    %305 = vmatprep.subr.mxu0 0.0
    %306 = vmatpush2.msra.mxu0 0.0
    %307 = vmatprep.subr.mxu0 0.0
    %308 = vmatpush2.msra.mxu0 0.0
    %309 = vmatprep.subr.mxu0 0.0
    %310 = vmatpush2.msra.mxu0 0.0
    %311 = vmatprep.subr.mxu0 0.0
    %312 = vmatpush2.msra.mxu0 0.0
    %313 = vmatprep.subr.mxu0 0.0
    %314 = vmatpush2.msra.mxu0 0.0
    %315 = vmatprep.mubr.f32.mxu0 0.0
    %316 = vmatmul.mubr.f32.gmra.mxu0 %v227
    %v317 = vpop.f32.mrf.mxu0
    %v318 = vadd.f32 %v249, %v317
    %v319 = vpop.f32.mrf.mxu0
    %320 = vdwg.mxu0
    %v321 = vtanh.pop %v318
    %v322 = vld [vmem:[%s2] sm:$0x1]
    %v323 = vld [vmem:[%s2 + $0x1] sm:$0x1]
    %v324 = vld [vmem:[%s1] sm:$0xff]
    %v325 = vsub.f32 %v324, %v321
    %v326 = vmul.f32 %v325, %v325
    %v327 = vlaneseq
    %v328 = vshrl.u32 %v327, 7
    %v329 = vsub.s32 0, %v328
    %v330 = vrot.slane %v322, %v329
    %v331 = vmul.f32 %v326, %v330
    %v332 = vlaneseq
    %v333 = vshrl.u32 %v332, 7
    %v334 = vsub.s32 0, %v333
    %v335 = vrot.slane %v323, %v334
    %v336 = vadd.f32 %v331, %v335
    %vm337 = vcmask 31744
    %v338 = vsel %vm337, %v336, 0.0
    %339 = vadd.xlane.f32.xlu0 %v338
    %v340 = vpop.xlane.xlu0 %339
    %v341 = vmul.f32 %v340, -0.5
    %v342 = vlaneseq
    %v343 = vand.u32 %v342, 127
    %vm344 = vcmp.lt.s32.totalorder %v343, 4
    %vm345 = vcmp.eq.s32.totalorder %v343, 4
    %v346 = vsel %vm345, %v318, %v341
    %v347 = vsel %vm344, %v321, %v346
    %vm348 = vcmask 64512
    %349 = vst.msk [vmem:[#allocation5] sm:$0xff] %vm348, %v347
    // Predicated region
    $region42: #{tpu_custom_call.1} parent=1 // pred_check
      _
    $region43: #{tpu_custom_call.1} parent=1 // pred_check_branch
      %351 = sbr.rel (0) target = $region45
    $region44: #{tpu_custom_call.1} parent=1 // pred_region
      %s353 = ssub.s32 128, 128
      %354 = vsyncadd [#allocation4], %s353
      %s356 = sshll.u32 [#allocation5], 4
      %s357 = int_to_ptr.vmem [resolvable:$true] %s356
      %359 = dma.vmem_to_hbm [thread:$0]  %s357, 128, %s9, [#allocation4]
    $region45: #{tpu_custom_call.1} parent=1 // pred_fallthru
      _
    // Predicated region
    $region46: #{tpu_custom_call.1} parent=1 // pred_check
      _
    $region47: #{tpu_custom_call.1} parent=1 // pred_check_branch
      %361 = sbr.rel (0) target = $region49
    $region48: #{tpu_custom_call.1} parent=1 // pred_region
      %362 = dma.done [#allocation4], 128
    $region49: #{tpu_custom_call.1} parent=1 // pred_fallthru
      _
    %363 = vsyncpa [#allocation3], 1
    %364 = vsyncpa [#allocation4], 1

</llo_original>
